<compile_context>
chip_gen: v7x
topology: tpu7x:2x2x1
jax: 0.10.0
libtpu: 0.0.40
codegen_flags: <defaults>
</compile_context>

<pallas_src>
import jax
import jax.numpy as jnp
from jax.experimental import pallas as pl
from jax.experimental.pallas import tpu as pltpu

N_CLASSES = 21
LN_EPS = 1e-5


def _masked_token_kernel(x_ref, w_ref, b_ref, o_ref):
    # x_ref: (1, TM, F)    token tile for one batch element
    # w_ref: (21, F)       LN-affine-folded projection weight (un-transposed)
    # b_ref: (21, 1)       LN-affine-folded projection bias (column)
    # o_ref: (1, 21, TM)   logits tile, already in final (B, 21, N*L) layout
    x = x_ref[0].astype(jnp.float32)                       # (TM, F)

    # LayerNorm over the feature (last) dim (centered form: matches PyTorch
    # numerics; gamma/beta already folded into w_ref/b_ref).
    mean = jnp.mean(x, axis=-1, keepdims=True)
    centered = x - mean
    var = jnp.mean(centered * centered, axis=-1, keepdims=True)
    xn = centered * jax.lax.rsqrt(var + LN_EPS)            # (TM, F)

    # (21, F) x (TM, F) contracting on F -> (21, TM): MXU produces the output
    # directly in transposed orientation; no XLU transpose, no relayout of xn.
    logits = jax.lax.dot_general(
        w_ref[...].astype(jnp.float32), xn,
        dimension_numbers=(((1,), (1,)), ((), ())),
        preferred_element_type=jnp.float32)                # (21, TM)
    logits = logits + b_ref[...]                           # (21, 1) column bias

    o_ref[0] = logits.astype(o_ref.dtype)


def _default_tile_rows(f, itemsize):
    # Count the real in-kernel working set, not just the pipelined tiles:
    #   2x double-buffered (TM, F) input tile at x dtype
    #   ~3  f32 (TM, F) intermediates (x cast, centered, xn)
    #   2x double-buffered output tile (21 sublanes padded to 32) + f32 logits
    budget = 24 * 1024 * 1024          # headroom under the 32 MiB scoped limit
    per_row = f * (2 * itemsize + 3 * 4) + 32 * (2 * itemsize + 4)
    tm = budget // per_row
    # HBM roofline saturates around 512-1024-row tiles; the cap also keeps the
    # footprint safe on v7x's 64 MiB-per-TensorCore VMEM.
    tm = int(max(128, min(tm, 1024)))
    return (tm // 128) * 128


def masked_token_network(x, gamma, beta, w, b, *, tile_rows=None):
    """x: (B, N, L, n_feat) -> logits (B, 21, N*L).

    gamma, beta: (n_feat,)     LayerNorm params
    w:           (21, n_feat)  PyTorch-style Linear weight
    b:           (21,)         Linear bias

    Math is done in f32 inside the kernel; output dtype matches x.dtype.
    """
    B, N, L, F = x.shape
    NL = N * L

    # Fold the LayerNorm affine into the projection (host-side, tiny).
    w32 = w.astype(jnp.float32)
    w_eff = w32 * gamma.astype(jnp.float32)[None, :]               # (21, F)
    b_eff = (b.astype(jnp.float32)
             + w32 @ beta.astype(jnp.float32)).reshape(N_CLASSES, 1)

    itemsize = jnp.dtype(x.dtype).itemsize
    if tile_rows is None:
        TM = _default_tile_rows(F, itemsize)
    else:
        TM = max(128, (int(tile_rows) // 128) * 128)
    if NL <= TM:
        TM = NL            # one tile per batch row; block dims == full dims
    num_tiles = pl.cdiv(NL, TM)

    # Free reshape (merges contiguous dims) — no extra HBM pass, no padding.
    x3 = x.reshape(B, NL, F)

    out = pl.pallas_call(
        _masked_token_kernel,
        out_shape=jax.ShapeDtypeStruct((B, N_CLASSES, NL), x.dtype),
        grid_spec=pltpu.PrefetchScalarGridSpec(
            num_scalar_prefetch=0,
            grid=(B, num_tiles),
            in_specs=[
                pl.BlockSpec((1, TM, F), lambda bi, ti: (bi, ti, 0)),
                pl.BlockSpec((N_CLASSES, F), lambda bi, ti: (0, 0)),
                pl.BlockSpec((N_CLASSES, 1), lambda bi, ti: (0, 0)),
            ],
            out_specs=pl.BlockSpec((1, N_CLASSES, TM),
                                   lambda bi, ti: (bi, 0, ti)),
        ),
        compiler_params=pltpu.CompilerParams(
            dimension_semantics=("parallel", "parallel"),
            vmem_limit_bytes=32 * 1024 * 1024,
        ),
    )(x3, w_eff, b_eff)
    return out                                                     # (B, 21, N*L)


def _reference(x, gamma, beta, w, b):
    xf = x.astype(jnp.float32)
    mean = jnp.mean(xf, axis=-1, keepdims=True)
    var = jnp.mean((xf - mean) ** 2, axis=-1, keepdims=True)
    xn = (xf - mean) * jax.lax.rsqrt(var + LN_EPS)
    y = xn * gamma + beta
    logits = y @ w.T.astype(jnp.float32) + b                       # (B, N, L, 21)
    B, N, L = x.shape[:3]
    return logits.transpose(0, 3, 1, 2).reshape(B, N_CLASSES, N * L)


if __name__ == "__main__":
    key = jax.random.PRNGKey(0)
    kx, kg, kbe, kw, kb, kx2 = jax.random.split(key, 6)

    # Primary small-shape check: B=2, N=8, L=8, n_feat=32 (N*L = 64 tokens).
    B, N, L, F = 2, 8, 8, 32
    x = jax.random.normal(kx, (B, N, L, F), dtype=jnp.float32)

    # Non-trivial LayerNorm affine to exercise the gamma/beta folding.
    gamma = 1.0 + 0.1 * jax.random.normal(kg, (F,), dtype=jnp.float32)
    beta = 0.1 * jax.random.normal(kbe, (F,), dtype=jnp.float32)
    bound = 1.0 / (F ** 0.5)
    w = jax.random.uniform(kw, (N_CLASSES, F), minval=-bound, maxval=bound,
                           dtype=jnp.float32)
    b = jax.random.uniform(kb, (N_CLASSES,), minval=-bound, maxval=bound,
                           dtype=jnp.float32)

    out = jax.block_until_ready(masked_token_network(x, gamma, beta, w, b))
    ref = _reference(x, gamma, beta, w, b)
    assert out.shape == (B, N_CLASSES, N * L), out.shape
    assert jnp.allclose(out, ref, atol=1e-4, rtol=1e-4), \
        float(jnp.max(jnp.abs(out - ref)))

    # Secondary check: multi-tile grid with a ragged last row-tile
    # (N*L = 320, TM = 128 -> 3 tiles, last one partially filled).
    N2, L2 = 8, 40
    x2 = jax.random.normal(kx2, (B, N2, L2, F), dtype=jnp.float32)
    out2 = jax.block_until_ready(
        masked_token_network(x2, gamma, beta, w, b, tile_rows=128))
    ref2 = _reference(x2, gamma, beta, w, b)
    assert out2.shape == (B, N_CLASSES, N2 * L2), out2.shape
    assert jnp.allclose(out2, ref2, atol=1e-4, rtol=1e-4), \
        float(jnp.max(jnp.abs(out2 - ref2)))

    print("KERNEL_OK")
</pallas_src>

<mosaic_0001>
module attributes {stable_mosaic.version = 11 : i64} {
  func.func @_masked_token_kernel(%arg0: i32, %arg1: i32, %arg2: memref<1x64x32xf32, #tpu.memory_space<vmem>>, %arg3: memref<21x32xf32, #tpu.memory_space<vmem>>, %arg4: memref<21x1xf32, #tpu.memory_space<vmem>>, %arg5: memref<1x21x64xf32, #tpu.memory_space<vmem>>) attributes {dimension_semantics = [#tpu.dimension_semantics<parallel>, #tpu.dimension_semantics<parallel>], iteration_bounds = array<i64: 2, 1>, scalar_prefetch = 0 : i64, scratch_operands = 0 : i64, tpu.core_type = #tpu.core_type<tc>, window_params = [{transform_indices = @transform_0, window_bounds = array<i64: 1, 64, 32>}, {pipeline_mode = #tpu.pipeline_mode<synchronous>, transform_indices = @transform_1, window_bounds = array<i64: 21, 32>}, {pipeline_mode = #tpu.pipeline_mode<synchronous>, transform_indices = @transform_2, window_bounds = array<i64: 21, 1>}, {transform_indices = @transform_3, window_bounds = array<i64: 1, 21, 64>}]} {
    %c0 = arith.constant 0 : index
    %c0_0 = arith.constant 0 : index
    %c0_1 = arith.constant 0 : index
    %0 = vector.load %arg2[%c0, %c0_0, %c0_1] : memref<1x64x32xf32, #tpu.memory_space<vmem>>, vector<1x64x32xf32>
    %1 = vector.shape_cast %0 : vector<1x64x32xf32> to vector<64x32xf32>
    %cst = arith.constant dense<0.000000e+00> : vector<64xf32>
    %2 = vector.multi_reduction <add>, %1, %cst [1] : vector<64x32xf32> to vector<64xf32>
    %3 = vector.shape_cast %2 : vector<64xf32> to vector<64x1xf32>
    %cst_2 = arith.constant 3.200000e+01 : f32
    %4 = vector.broadcast %cst_2 : f32 to vector<64x1xf32>
    %5 = arith.divf %3, %4 : vector<64x1xf32>
    %6 = vector.broadcast %5 : vector<64x1xf32> to vector<64x32xf32>
    %7 = arith.subf %1, %6 : vector<64x32xf32>
    %8 = arith.mulf %7, %7 : vector<64x32xf32>
    %cst_3 = arith.constant dense<0.000000e+00> : vector<64xf32>
    %9 = vector.multi_reduction <add>, %8, %cst_3 [1] : vector<64x32xf32> to vector<64xf32>
    %10 = vector.shape_cast %9 : vector<64xf32> to vector<64x1xf32>
    %cst_4 = arith.constant 3.200000e+01 : f32
    %11 = vector.broadcast %cst_4 : f32 to vector<64x1xf32>
    %12 = arith.divf %10, %11 : vector<64x1xf32>
    %cst_5 = arith.constant 9.99999974E-6 : f32
    %13 = vector.broadcast %cst_5 : f32 to vector<64x1xf32>
    %14 = arith.addf %12, %13 : vector<64x1xf32>
    %15 = math.rsqrt %14 : vector<64x1xf32>
    %16 = vector.broadcast %15 : vector<64x1xf32> to vector<64x32xf32>
    %17 = arith.mulf %7, %16 : vector<64x32xf32>
    %c0_6 = arith.constant 0 : index
    %c0_7 = arith.constant 0 : index
    %18 = vector.load %arg3[%c0_6, %c0_7] : memref<21x32xf32, #tpu.memory_space<vmem>>, vector<21x32xf32>
    %cst_8 = arith.constant dense<0.000000e+00> : vector<21x64xf32>
    %19 = tpu.matmul %18, %17, %cst_8 {dimension_numbers = #tpu.dot_dimension_numbers<[1], [1], [0], [0], [0, 0, 1, 0], [], []>} : vector<21x32xf32>, vector<64x32xf32>, vector<21x64xf32> -> vector<21x64xf32>
    %c0_9 = arith.constant 0 : index
    %c0_10 = arith.constant 0 : index
    %20 = vector.load %arg4[%c0_9, %c0_10] : memref<21x1xf32, #tpu.memory_space<vmem>>, vector<21x1xf32>
    %21 = vector.broadcast %20 : vector<21x1xf32> to vector<21x64xf32>
    %22 = arith.addf %19, %21 : vector<21x64xf32>
    %c0_11 = arith.constant 0 : index
    %c0_12 = arith.constant 0 : index
    %c0_13 = arith.constant 0 : index
    %23 = vector.load %arg5[%c0_11, %c0_12, %c0_13] : memref<1x21x64xf32, #tpu.memory_space<vmem>>, vector<1x21x64xf32>
    %24 = vector.shape_cast %23 : vector<1x21x64xf32> to vector<21x64xf32>
    %25 = vector.shape_cast %22 : vector<21x64xf32> to vector<1x21x64xf32>
    tpu.vector_store %arg5[%c0_11, %c0_12, %c0_13], %25 {strides = array<i32>} : memref<1x21x64xf32, #tpu.memory_space<vmem>>, vector<1x21x64xf32>,
    return
  }
  func.func @transform_0(%arg0: i32, %arg1: i32) -> (i32, i32, i32) {
    %c0_i32 = arith.constant 0 : i32
    %c0_i32_0 = arith.constant 0 : i32
    return %arg0, %arg1, %c0_i32 : i32, i32, i32
  }
  func.func @transform_1(%arg0: i32, %arg1: i32) -> (i32, i32) {
    %c0_i32 = arith.constant 0 : i32
    %c0_i32_0 = arith.constant 0 : i32
    %c0_i32_1 = arith.constant 0 : i32
    return %c0_i32, %c0_i32_0 : i32, i32
  }
  func.func @transform_2(%arg0: i32, %arg1: i32) -> (i32, i32) {
    %c0_i32 = arith.constant 0 : i32
    %c0_i32_0 = arith.constant 0 : i32
    %c0_i32_1 = arith.constant 0 : i32
    return %c0_i32, %c0_i32_0 : i32, i32
  }
  func.func @transform_3(%arg0: i32, %arg1: i32) -> (i32, i32, i32) {
    %c0_i32 = arith.constant 0 : i32
    %c0_i32_0 = arith.constant 0 : i32
    return %arg0, %c0_i32, %arg1 : i32, i32, i32
  }
}

</mosaic_0001>

<llo_original>
// kernel: tpu_custom_call.1
$region0: #{tpu_custom_call.1}
  #allocation0 [shape = 'u32[]', space=smem, size = 0x4, offset = 0x4, fixed_abs, tag = 'smem constant byte address 0x4 - core index']
  #allocation1 [shape = 'u32[144,128]{1,0:T(1,128)}', space=vmem, size = 0x12000, scoped, tag = 'internal scratch']
  %s0 = inlined_call_operand.vmem [shape: f32[2,64,32], index: 0, kind: input, shape index: {}]
  %s1 = inlined_call_operand.vmem [shape: f32[21,32], index: 1, kind: input, shape index: {}]
  %s2 = inlined_call_operand.vmem [shape: f32[21,1], index: 2, kind: input, shape index: {}]
  %s3 = inlined_call_operand.vmem [shape: f32[2,21,64], index: 3, kind: output, shape index: {}]
  %s4 = sld [smem:[#allocation0]]
  $region45: #{tpu_custom_call.1} parent=0
    _
  %s6 = ssub.s32 1, %s4
  %s7 = scalar_select 0, %s6, %s4
  loop: start=0, step=1, limit=4
  $region2: #{tpu_custom_call.1} parent=0 // loop_pre_header
    _
  $region3: #{tpu_custom_call.1} parent=0 // loop_header
    %s9 = sphi 0, %s13
    %p10 = scmp.ge.s32.totalorder %s9, 4
    %s16 = sphi 0, %s28
    %s17 = sphi 0, %s24
    %s18 = sphi 0, %s16
    %s19 = sphi 0, %s17
    %s20 = sphi 0, %s18
    %s21 = sphi 0, %s19
    %s33 = sphi 0, %s35
    %s36 = sphi 0, %s33
    %s37 = sphi 0, %s36
    %s53 = sphi 0, %s37
    %s57 = sphi 0, %s57
    %s59 = sphi 0, %s57
    %s60 = sphi 0, %s59
    %s74 = sphi 0, %s60
    %s78 = sphi 0, %s78
    %s80 = sphi 0, %s78
    %s81 = sphi 0, %s80
    %s95 = sphi 0, %s81
    %s103 = sphi 0, %s105
    %s106 = sphi 0, %s103
    %s107 = sphi 0, %s106
    %s123 = sphi 0, %s107
  $region4: #{tpu_custom_call.1} parent=0 // loop_header_branch
    %12 = sbr.rel (%p10) target = $region8
  $region5: #{tpu_custom_call.1} parent=0 // loop_body
    %s14 = ssub.s32 %s9, 1
    %s15 = ssub.s32 %s9, 2
    %s22 = sadd.s32 1, %s17
    %p23 = scmp.ge.s32.totalorder %s22, 1
    %s24 = scalar_select %p23, 0, %s22
    %s25 = sadd.s32 1, %s16
    %s26 = scalar_select %p23, %s25, %s16
    %p27 = scmp.ge.s32.totalorder %s26, 2
    %s28 = scalar_select %p27, 0, %s26
    %s29 = ssub.s32 %s16, %s28
    %s30 = ssub.s32 %s17, %s24
    %s31 = sor.u32 %s29, %s30
    %p32 = scmp.eq.s32.totalorder %s31, 0
    %s34 = sadd.s32 %s33, 1
    %s35 = scalar_select %p32, %s33, %s34
    %p38 = pneg %p32
    %p39 = scmp.eq.s32.totalorder %s9, 1
    %p40 = por %p38, %p39
    %p41 = scmp.ne.s32.totalorder %s33, %s36
    %p42 = scmp.eq.s32.totalorder %s9, 0
    %p43 = por %p41, %p42
    %p44 = scmp.ne.s32.totalorder %s33, %s36
    %p45 = scmp.eq.s32.totalorder %s14, 1
    %p46 = por %p44, %p45
    %p47 = scmp.ne.s32.totalorder %s36, %s37
    %p48 = scmp.eq.s32.totalorder %s14, 0
    %p49 = por %p47, %p48
    %p50 = scmp.ne.s32.totalorder %s36, %s37
    %p51 = scmp.eq.s32.totalorder %s15, 1
    %p52 = por %p50, %p51
    %p54 = scmp.ne.s32.totalorder %s37, %s53
    %p55 = scmp.eq.s32.totalorder %s15, 0
    %p56 = por %p54, %p55
    %s58 = sadd.s32 %s57, 1
    %p61 = scmp.eq.s32.totalorder %s9, 1
    %p62 = scmp.ne.s32.totalorder %s57, %s59
    %p63 = scmp.eq.s32.totalorder %s9, 0
    %p64 = por %p62, %p63
    %p65 = scmp.ne.s32.totalorder %s57, %s59
    %p66 = scmp.eq.s32.totalorder %s14, 1
    %p67 = por %p65, %p66
    %p68 = scmp.ne.s32.totalorder %s59, %s60
    %p69 = scmp.eq.s32.totalorder %s14, 0
    %p70 = por %p68, %p69
    %p71 = scmp.ne.s32.totalorder %s59, %s60
    %p72 = scmp.eq.s32.totalorder %s15, 1
    %p73 = por %p71, %p72
    %p75 = scmp.ne.s32.totalorder %s60, %s74
    %p76 = scmp.eq.s32.totalorder %s15, 0
    %p77 = por %p75, %p76
    %s79 = sadd.s32 %s78, 1
    %p82 = scmp.eq.s32.totalorder %s9, 1
    %p83 = scmp.ne.s32.totalorder %s78, %s80
    %p84 = scmp.eq.s32.totalorder %s9, 0
    %p85 = por %p83, %p84
    %p86 = scmp.ne.s32.totalorder %s78, %s80
    %p87 = scmp.eq.s32.totalorder %s14, 1
    %p88 = por %p86, %p87
    %p89 = scmp.ne.s32.totalorder %s80, %s81
    %p90 = scmp.eq.s32.totalorder %s14, 0
    %p91 = por %p89, %p90
    %p92 = scmp.ne.s32.totalorder %s80, %s81
    %p93 = scmp.eq.s32.totalorder %s15, 1
    %p94 = por %p92, %p93
    %p96 = scmp.ne.s32.totalorder %s81, %s95
    %p97 = scmp.eq.s32.totalorder %s15, 0
    %p98 = por %p96, %p97
    %s99 = ssub.s32 %s16, %s28
    %s100 = ssub.s32 %s17, %s24
    %s101 = sor.u32 %s99, %s100
    %p102 = scmp.eq.s32.totalorder %s101, 0
    %s104 = sadd.s32 %s103, 1
    %s105 = scalar_select %p102, %s103, %s104
    %p108 = pneg %p102
    %p109 = scmp.eq.s32.totalorder %s9, 1
    %p110 = por %p108, %p109
    %p111 = scmp.ne.s32.totalorder %s103, %s106
    %p112 = scmp.eq.s32.totalorder %s9, 0
    %p113 = por %p111, %p112
    %p114 = scmp.ne.s32.totalorder %s103, %s106
    %p115 = scmp.eq.s32.totalorder %s14, 1
    %p116 = por %p114, %p115
    %p117 = scmp.ne.s32.totalorder %s106, %s107
    %p118 = scmp.eq.s32.totalorder %s14, 0
    %p119 = por %p117, %p118
    %p120 = scmp.ne.s32.totalorder %s106, %s107
    %p121 = scmp.eq.s32.totalorder %s15, 1
    %p122 = por %p120, %p121
    %p124 = scmp.ne.s32.totalorder %s107, %s123
    %p125 = scmp.eq.s32.totalorder %s15, 0
    %p126 = por %p124, %p125
    %p127 = scmp.le.s32.totalorder 1, %s9
    %p128 = scmp.lt.s32.totalorder %s9, 3
    %p129 = pnand %p127, %p128
    %p130 = pneg %p129
    // Predicated region
    $region9: #{tpu_custom_call.1} parent=5 // pred_check
      _
    $region10: #{tpu_custom_call.1} parent=5 // pred_check_branch
      %132 = sbr.rel (%p129) target = $region12
    $region11: #{tpu_custom_call.1} parent=5 // pred_region
      %s133 = ssub.s32 %s9, 1
      // Predicated region
      $region13: #{tpu_custom_call.1} parent=11 // pred_check
        %p134 = pneg %p70
      $region14: #{tpu_custom_call.1} parent=11 // pred_check_branch
        %136 = sbr.rel (%p134) target = $region16
      $region15: #{tpu_custom_call.1} parent=11 // pred_region
        _
      $region16: #{tpu_custom_call.1} parent=11 // pred_fallthru
        _
      // Predicated region
      $region17: #{tpu_custom_call.1} parent=11 // pred_check
        %p137 = pneg %p91
      $region18: #{tpu_custom_call.1} parent=11 // pred_check_branch
        %139 = sbr.rel (%p137) target = $region20
      $region19: #{tpu_custom_call.1} parent=11 // pred_region
        _
      $region20: #{tpu_custom_call.1} parent=11 // pred_fallthru
        _
    $region12: #{tpu_custom_call.1} parent=5 // pred_fallthru
      _
    %p140 = scmp.lt.s32.totalorder %s9, 2
    // Predicated region
    $region21: #{tpu_custom_call.1} parent=5 // pred_check
      %p141 = pneg %p140
    $region22: #{tpu_custom_call.1} parent=5 // pred_check_branch
      %143 = sbr.rel (%p141) target = $region24
    $region23: #{tpu_custom_call.1} parent=5 // pred_region
      // Predicated region
      $region25: #{tpu_custom_call.1} parent=23 // pred_check
        %p144 = pneg %p43
      $region26: #{tpu_custom_call.1} parent=23 // pred_check_branch
        %146 = sbr.rel (%p144) target = $region28
      $region27: #{tpu_custom_call.1} parent=23 // pred_region
        %s147 = smul.u32 8, %s17
        %p148 = scmp.lt.s32.totalorder %s16, 1
        %s149 = scalar_select %p148, %s16, 1
        %p150 = scmp.lt.s32.totalorder %s147, 7
        %s151 = scalar_select %p150, %s147, 7
        %s152 = smul.addr %s149, 8
        %s153 = sadd.s32 %s151, %s152
        %s154 = smul.addr %s153, 8
        %s155 = scalar_lea.vmem %s0, %s154
        %s156 = smul.u32 8, %s17
      $region28: #{tpu_custom_call.1} parent=23 // pred_fallthru
        _
    $region24: #{tpu_custom_call.1} parent=5 // pred_fallthru
      _
    %p157 = scmp.le.s32.totalorder 1, %s9
    %p158 = scmp.lt.s32.totalorder %s9, 3
    %p159 = pnand %p157, %p158
    %p160 = pneg %p159
    // Predicated region
    $region29: #{tpu_custom_call.1} parent=5 // pred_check
      _
    $region30: #{tpu_custom_call.1} parent=5 // pred_check_branch
      %162 = sbr.rel (%p159) target = $region32
    $region31: #{tpu_custom_call.1} parent=5 // pred_region
      %s163 = ssub.s32 %s9, 1
      %s164 = smul.u32 8, %s19
      %p165 = scmp.lt.s32.totalorder %s18, 1
      %s166 = scalar_select %p165, %s18, 1
      %p167 = scmp.lt.s32.totalorder %s164, 7
      %s168 = scalar_select %p167, %s164, 7
      %s169 = smul.addr %s166, 8
      %s170 = sadd.s32 %s168, %s169
      %s171 = smul.addr %s170, 8
      %s172 = scalar_lea.vmem %s0, %s171
      %p173 = pneg %p49
      %p174 = pneg %p46
      %p175 = pneg %p70
      %p176 = pneg %p67
      %p177 = pneg %p91
      %p178 = pneg %p88
      %p179 = pneg %p119
      %p180 = pneg %p116
      %p181 = scmp.lt.s32.totalorder %s18, 1
      %s182 = scalar_select %p181, %s18, 1
      %p183 = scmp.lt.s32.totalorder %s19, 0
      %s184 = scalar_select %p183, %s19, 0
      %s185 = smul.addr %s182, 3
      %s186 = sadd.s32 %s184, %s185
      %s187 = smul.addr %s186, 8
      %s188 = scalar_lea.vmem %s3, %s187
      %s189 = smul.u32 8, %s19
      %p190 = scmp.lt.s32.totalorder %s18, 1
      %s191 = scalar_select %p190, %s18, 1
      %p192 = scmp.lt.s32.totalorder %s189, 7
      %s193 = scalar_select %p192, %s189, 7
      %s194 = smul.addr %s191, 8
      %s195 = sadd.s32 %s193, %s194
      %s196 = smul.addr %s195, 8
      %s197 = scalar_lea.vmem %s0, %s196
      %s198 = smul.u32 8, %s19
      %p199 = scmp.lt.s32.totalorder %s18, 1
      %s200 = scalar_select %p199, %s18, 1
      %p201 = scmp.lt.s32.totalorder %s19, 0
      %s202 = scalar_select %p201, %s19, 0
      %s203 = smul.addr %s200, 3
      %s204 = sadd.s32 %s202, %s203
      %s205 = smul.addr %s204, 8
      %s206 = scalar_lea.vmem %s3, %s205
      %v207 = vld [vmem:[%s197] sm:$0xff]
      %v208 = vld [vmem:[%s197 + $0x8] sm:$0xff]
      %v209 = vld [vmem:[%s197 + $0x10] sm:$0xff]
      %v210 = vld [vmem:[%s197 + $0x18] sm:$0xff]
      %v211 = vld [vmem:[%s197 + $0x20] sm:$0xff]
      %v212 = vld [vmem:[%s197 + $0x28] sm:$0xff]
      %v213 = vld [vmem:[%s197 + $0x30] sm:$0xff]
      %v214 = vld [vmem:[%s197 + $0x38] sm:$0xff]
      %vm215 = vcmask 261120
      %v216 = vsel %vm215, %v207, 0.0
      %217 = vadd.xlane.f32.xlu0 %v216
      %v218 = vpop.xlane.xlu0 %217
      %v219 = vsel %vm215, %v208, 0.0
      %220 = vadd.xlane.f32.xlu0 %v219
      %v221 = vpop.xlane.xlu0 %220
      %v222 = vsel %vm215, %v209, 0.0
      %223 = vadd.xlane.f32.xlu0 %v222
      %v224 = vpop.xlane.xlu0 %223
      %v225 = vsel %vm215, %v210, 0.0
      %226 = vadd.xlane.f32.xlu0 %v225
      %v227 = vpop.xlane.xlu0 %226
      %v228 = vsel %vm215, %v211, 0.0
      %229 = vadd.xlane.f32.xlu0 %v228
      %v230 = vpop.xlane.xlu0 %229
      %v231 = vsel %vm215, %v212, 0.0
      %232 = vadd.xlane.f32.xlu0 %v231
      %v233 = vpop.xlane.xlu0 %232
      %v234 = vsel %vm215, %v213, 0.0
      %235 = vadd.xlane.f32.xlu0 %v234
      %v236 = vpop.xlane.xlu0 %235
      %v237 = vsel %vm215, %v214, 0.0
      %238 = vadd.xlane.f32.xlu0 %v237
      %v239 = vpop.xlane.xlu0 %238
      %v240 = vrcp.pop 32.0
      %v241 = vmul.f32 %v218, %v240
      %v242 = vmul.f32 %v221, %v240
      %v243 = vmul.f32 %v224, %v240
      %v244 = vmul.f32 %v227, %v240
      %v245 = vmul.f32 %v230, %v240
      %v246 = vmul.f32 %v233, %v240
      %v247 = vmul.f32 %v236, %v240
      %v248 = vmul.f32 %v239, %v240
      %v249 = vsub.f32 %v207, %v241
      %v250 = vsub.f32 %v208, %v242
      %v251 = vsub.f32 %v209, %v243
      %v252 = vsub.f32 %v210, %v244
      %v253 = vsub.f32 %v211, %v245
      %v254 = vsub.f32 %v212, %v246
      %v255 = vsub.f32 %v213, %v247
      %v256 = vsub.f32 %v214, %v248
      %v257 = vmul.f32 %v249, %v249
      %v258 = vmul.f32 %v250, %v250
      %v259 = vmul.f32 %v251, %v251
      %v260 = vmul.f32 %v252, %v252
      %v261 = vmul.f32 %v253, %v253
      %v262 = vmul.f32 %v254, %v254
      %v263 = vmul.f32 %v255, %v255
      %v264 = vmul.f32 %v256, %v256
      %v265 = vsel %vm215, %v257, 0.0
      %266 = vadd.xlane.f32.xlu0 %v265
      %v267 = vpop.xlane.xlu0 %266
      %v268 = vsel %vm215, %v258, 0.0
      %269 = vadd.xlane.f32.xlu0 %v268
      %v270 = vpop.xlane.xlu0 %269
      %v271 = vsel %vm215, %v259, 0.0
      %272 = vadd.xlane.f32.xlu0 %v271
      %v273 = vpop.xlane.xlu0 %272
      %v274 = vsel %vm215, %v260, 0.0
      %275 = vadd.xlane.f32.xlu0 %v274
      %v276 = vpop.xlane.xlu0 %275
      %v277 = vsel %vm215, %v261, 0.0
      %278 = vadd.xlane.f32.xlu0 %v277
      %v279 = vpop.xlane.xlu0 %278
      %v280 = vsel %vm215, %v262, 0.0
      %281 = vadd.xlane.f32.xlu0 %v280
      %v282 = vpop.xlane.xlu0 %281
      %v283 = vsel %vm215, %v263, 0.0
      %284 = vadd.xlane.f32.xlu0 %v283
      %v285 = vpop.xlane.xlu0 %284
      %v286 = vsel %vm215, %v264, 0.0
      %287 = vadd.xlane.f32.xlu0 %v286
      %v288 = vpop.xlane.xlu0 %287
      %v289 = vmul.f32 %v267, %v240
      %v290 = vmul.f32 %v270, %v240
      %v291 = vmul.f32 %v273, %v240
      %v292 = vmul.f32 %v276, %v240
      %v293 = vmul.f32 %v279, %v240
      %v294 = vmul.f32 %v282, %v240
      %v295 = vmul.f32 %v285, %v240
      %v296 = vmul.f32 %v288, %v240
      %v297 = vadd.f32 %v289, 1e-05
      %v298 = vadd.f32 %v290, 1e-05
      %v299 = vadd.f32 %v291, 1e-05
      %v300 = vadd.f32 %v292, 1e-05
      %v301 = vadd.f32 %v293, 1e-05
      %v302 = vadd.f32 %v294, 1e-05
      %v303 = vadd.f32 %v295, 1e-05
      %v304 = vadd.f32 %v296, 1e-05
      %v305 = vrsqrt.pop %v297
      %v306 = vrsqrt.pop %v298
      %v307 = vrsqrt.pop %v299
      %v308 = vrsqrt.pop %v300
      %v309 = vrsqrt.pop %v301
      %v310 = vrsqrt.pop %v302
      %v311 = vrsqrt.pop %v303
      %v312 = vrsqrt.pop %v304
      %v313 = vmul.f32 %v249, %v305
      %v314 = vmul.f32 %v250, %v306
      %v315 = vmul.f32 %v251, %v307
      %v316 = vmul.f32 %v252, %v308
      %v317 = vmul.f32 %v253, %v309
      %v318 = vmul.f32 %v254, %v310
      %v319 = vmul.f32 %v255, %v311
      %v320 = vmul.f32 %v256, %v312
      %v321 = vld [vmem:[%s1] sm:$0xff]
      %v322 = vld [vmem:[%s1 + $0x8] sm:$0xff]
      %v323 = vld [vmem:[%s1 + $0x10] sm:$0x1f]
      %v324 = vld [vmem:[%s2] sm:$0xff]
      %v325 = vld [vmem:[%s2 + $0x8] sm:$0xff]
      %v326 = vld [vmem:[%s2 + $0x10] sm:$0x1f]
      %328 = vset.pattern.permute.xlu0 0
      %329 = vperm.xlu0 %328, %v324
      %v330 = vpop.permute.xlu0 %329
      %333 = vset.pattern.permute.xlu0 0
      %334 = vperm.xlu0 %333, %v325
      %v335 = vpop.permute.xlu0 %334
      %338 = vset.pattern.permute.xlu0 0
      %339 = vperm.xlu0 %338, %v326
      %v340 = vpop.permute.xlu0 %339
      %v343 = vsel %vm215, %v321, 0
      %v346 = vsel %vm215, %v322, 0
      %v349 = vsel %vm215, %v323, 0
      %v352 = vsel %vm215, %v313, 0
      %v355 = vsel %vm215, %v314, 0
      %v358 = vsel %vm215, %v315, 0
      %v361 = vsel %vm215, %v316, 0
      %v364 = vsel %vm215, %v317, 0
      %v367 = vsel %vm215, %v318, 0
      %v370 = vsel %vm215, %v319, 0
      %v373 = vsel %vm215, %v320, 0
      %375 = vmatprep.subr.mxu0 0.0
      %376 = vmatpush1.xpose.msra.mxu0 %v352
      %377 = vmatprep.subr.mxu0 0.0
      %378 = vmatpush1.xpose.msra.mxu0 %v355
      %379 = vmatprep.subr.mxu0 0.0
      %380 = vmatpush1.xpose.msra.mxu0 %v358
      %381 = vmatprep.subr.mxu0 0.0
      %382 = vmatpush1.xpose.msra.mxu0 %v361
      %383 = vmatprep.subr.mxu0 0.0
      %384 = vmatpush1.xpose.msra.mxu0 %v364
      %385 = vmatprep.subr.mxu0 0.0
      %386 = vmatpush1.xpose.msra.mxu0 %v367
      %387 = vmatprep.subr.mxu0 0.0
      %388 = vmatpush1.xpose.msra.mxu0 %v370
      %389 = vmatprep.subr.mxu0 0.0
      %390 = vmatpush1.xpose.msra.mxu0 %v373
      %391 = vmatprep.subr.mxu0 0.0
      %392 = vmatpush1.xpose.msra.mxu0 0.0
      %393 = vmatprep.subr.mxu0 0.0
      %394 = vmatpush1.xpose.msra.mxu0 0.0
      %395 = vmatprep.subr.mxu0 0.0
      %396 = vmatpush1.xpose.msra.mxu0 0.0
      %397 = vmatprep.subr.mxu0 0.0
      %398 = vmatpush1.xpose.msra.mxu0 0.0
      %399 = vmatprep.subr.mxu0 0.0
      %400 = vmatpush1.xpose.msra.mxu0 0.0
      %401 = vmatprep.subr.mxu0 0.0
      %402 = vmatpush1.xpose.msra.mxu0 0.0
      %403 = vmatprep.subr.mxu0 0.0
      %404 = vmatpush1.xpose.msra.mxu0 0.0
      %405 = vmatprep.subr.mxu0 0.0
      %406 = vmatpush1.xpose.msra.mxu0 0.0
      %407 = vmatprep.subr.mxu0 0.0
      %408 = vmatpush1.xpose.msra.mxu0 0.0
      %409 = vmatprep.subr.mxu0 0.0
      %410 = vmatpush1.xpose.msra.mxu0 0.0
      %411 = vmatprep.subr.mxu0 0.0
      %412 = vmatpush1.xpose.msra.mxu0 0.0
      %413 = vmatprep.subr.mxu0 0.0
      %414 = vmatpush1.xpose.msra.mxu0 0.0
      %415 = vmatprep.subr.mxu0 0.0
      %416 = vmatpush1.xpose.msra.mxu0 0.0
      %417 = vmatprep.subr.mxu0 0.0
      %418 = vmatpush1.xpose.msra.mxu0 0.0
      %419 = vmatprep.subr.mxu0 0.0
      %420 = vmatpush1.xpose.msra.mxu0 0.0
      %421 = vmatprep.subr.mxu0 0.0
      %422 = vmatpush1.xpose.msra.mxu0 0.0
      %423 = vmatprep.subr.mxu0 0.0
      %424 = vmatpush1.xpose.msra.mxu0 0.0
      %425 = vmatprep.subr.mxu0 0.0
      %426 = vmatpush1.xpose.msra.mxu0 0.0
      %427 = vmatprep.subr.mxu0 0.0
      %428 = vmatpush1.xpose.msra.mxu0 0.0
      %429 = vmatprep.subr.mxu0 0.0
      %430 = vmatpush1.xpose.msra.mxu0 0.0
      %431 = vmatprep.subr.mxu0 0.0
      %432 = vmatpush1.xpose.msra.mxu0 0.0
      %433 = vmatprep.subr.mxu0 0.0
      %434 = vmatpush1.xpose.msra.mxu0 0.0
      %435 = vmatprep.subr.mxu0 0.0
      %436 = vmatpush1.xpose.msra.mxu0 0.0
      %437 = vmatprep.subr.mxu0 0.0
      %438 = vmatpush1.xpose.msra.mxu0 0.0
      %439 = vmatprep.mubr.f32.mxu0 0.0
      %440 = vmatmul.mubr.f32.gmra.mrb[0].mxu0 %v343
      %v441 = vpop.f32.mrb[0].mxu0
      %v442 = vadd.f32 %v330, %v441
      %v443 = vpop.f32.mrb[0].mxu0
      %444 = vmatprep.mubr.f32.mxu0 0.0
      %445 = vmatmul.mubr.f32.gmra.mrb[0].mxu0 %v346
      %v446 = vpop.f32.mrb[0].mxu0
      %v447 = vadd.f32 %v335, %v446
      %v448 = vpop.f32.mrb[0].mxu0
      %449 = vmatprep.mubr.f32.mxu0 0.0
      %450 = vmatmul.mubr.f32.gmra.mrb[0].mxu0 %v349
      %v451 = vpop.f32.mrb[0].mxu0
      %v452 = vadd.f32 %v340, %v451
      %v453 = vpop.f32.mrb[0].mxu0
      %454 = vdwg.mxu0
      %vm455 = vcmask 523264
      %456 = vst.msk [vmem:[%s206] sm:$0xff] %vm455, %v442
      %457 = vst.msk [vmem:[%s206 + $0x8] sm:$0xff] %vm455, %v447
      %vm458 = vcmask 520192
      %459 = vst.msk [vmem:[%s206 + $0x10] sm:$0x1f] %vm458, %v452
      %p460 = scmp.lt.s32.totalorder %s18, 1
      %s461 = scalar_select %p460, %s18, 1
      %p462 = scmp.lt.s32.totalorder %s19, 0
      %s463 = scalar_select %p462, %s19, 0
      %s464 = smul.addr %s461, 3
      %s465 = sadd.s32 %s463, %s464
      %s466 = smul.addr %s465, 8
      %s467 = scalar_lea.vmem %s3, %s466
      // Predicated region
      $region33: #{tpu_custom_call.1} parent=31 // pred_check
        %p468 = pneg %p116
      $region34: #{tpu_custom_call.1} parent=31 // pred_check_branch
        %470 = sbr.rel (%p468) target = $region36
      $region35: #{tpu_custom_call.1} parent=31 // pred_region
        _
      $region36: #{tpu_custom_call.1} parent=31 // pred_fallthru
        _
    $region32: #{tpu_custom_call.1} parent=5 // pred_fallthru
      _
    %p471 = scmp.le.s32.totalorder 2, %s9
    // Predicated region
    $region37: #{tpu_custom_call.1} parent=5 // pred_check
      %p472 = pneg %p471
    $region38: #{tpu_custom_call.1} parent=5 // pred_check_branch
      %474 = sbr.rel (%p472) target = $region40
    $region39: #{tpu_custom_call.1} parent=5 // pred_region
      %s475 = ssub.s32 %s9, 2
      // Predicated region
      $region41: #{tpu_custom_call.1} parent=39 // pred_check
        %p476 = pneg %p122
      $region42: #{tpu_custom_call.1} parent=39 // pred_check_branch
        %478 = sbr.rel (%p476) target = $region44
      $region43: #{tpu_custom_call.1} parent=39 // pred_region
        %p479 = scmp.lt.s32.totalorder %s20, 1
        %s480 = scalar_select %p479, %s20, 1
        %p481 = scmp.lt.s32.totalorder %s21, 0
        %s482 = scalar_select %p481, %s21, 0
        %s483 = smul.addr %s480, 3
        %s484 = sadd.s32 %s482, %s483
        %s485 = smul.addr %s484, 8
        %s486 = scalar_lea.vmem %s3, %s485
      $region44: #{tpu_custom_call.1} parent=39 // pred_fallthru
        _
    $region40: #{tpu_custom_call.1} parent=5 // pred_fallthru
      _
  $region6: #{tpu_custom_call.1} parent=0 // loop_footer
    %s13 = sadd.s32 1, %s9
  $region7: #{tpu_custom_call.1} parent=0 // loop_footer_branch
    %8 = sbr.rel target = $region3
  $region8: #{tpu_custom_call.1} parent=0 // loop_exit
    _

</llo_original>
